<compile_context>
chip_gen: v7x
topology: tpu7x:2x2x1
jax: 0.10.0
libtpu: 0.0.40
codegen_flags: <defaults>
</compile_context>

<pallas_src>
import functools

import jax
import jax.numpy as jnp
from jax.experimental import pallas as pl
from jax.experimental.pallas import tpu as pltpu


def _round_up(v, m):
    return (v + m - 1) // m * m


def _linear_kernel(x_ref, w_ref, b_ref, o_ref):
    # x_ref: (TB, K), w_ref: (N, K), b_ref: (1, N) f32, o_ref: (TB, N)
    # Contract K of x against K of w directly (PyTorch weight layout, no
    # pre-transposed copy); MXU accumulates in f32, bias epilogue stays f32.
    acc = jax.lax.dot_general(
        x_ref[...],
        w_ref[...],
        dimension_numbers=(((1,), (1,)), ((), ())),
        preferred_element_type=jnp.float32,
    )
    o_ref[...] = (acc + b_ref[...]).astype(o_ref.dtype)


@functools.partial(jax.jit, static_argnames=("block_b", "compute_dtype"))
def actor_forward(x, weight, bias, *, block_b=1024, compute_dtype=None):
    """Pallas equivalent of nn.Linear(2N+1, N): y = x @ W.T + b.

    x:      (B, 2N+1)
    weight: (N, 2N+1)   (PyTorch layout: out_features x in_features)
    bias:   (N,)
    returns (B, N) in x's original dtype.

    compute_dtype: optional streaming dtype (e.g. jnp.bfloat16). x/weight are
    cast before the kernel; accumulation and bias add remain f32.
    """
    B, K = x.shape
    N = weight.shape[0]
    out_dtype = x.dtype

    if compute_dtype is not None:
        x = x.astype(compute_dtype)
        weight = weight.astype(compute_dtype)
    in_itemsize = jnp.dtype(x.dtype).itemsize
    out_itemsize = jnp.dtype(out_dtype).itemsize

    # Sublane packing: 8 rows/vreg for 4-byte dtypes, 16 for 2-byte (bf16).
    sub = 8 if in_itemsize >= 4 else 16

    # Batch tile: multiple of `sub`; K and N are left unpadded (full-dim
    # blocks).  Clamp so large batches keep >=8 grid steps (v7x dual-TC)
    # while tiles stay >=512 rows for HBM-roofline efficiency.
    TB = min(_round_up(max(block_b, 1), sub), _round_up(B, sub))
    if TB > 512:
        TB = max(512, min(TB, _round_up(pl.cdiv(B, 8), sub)))
    TB = max(TB, sub)
    grid_b = pl.cdiv(B, TB)

    bias2d = bias.reshape(1, N).astype(jnp.float32)

    # Explicit scoped-VMEM limit sized from the actual footprint
    # (double-buffered x/out tiles + resident weight/bias), with headroom;
    # capped at 64 MiB so it is legal on every generation incl. v7x.
    lanes_k = _round_up(K, 128)
    lanes_n = _round_up(N, 128)
    vmem_est = (
        2 * TB * lanes_k * in_itemsize            # x tiles (double-buffered)
        + 2 * TB * lanes_n * out_itemsize         # out tiles (double-buffered)
        + 2 * _round_up(N, sub) * lanes_k * in_itemsize   # resident weight
        + 2 * 8 * lanes_n * 4                     # resident bias (f32)
    )
    vmem_limit = int(min(64 << 20, max(32 << 20, 2 * vmem_est + (2 << 20))))

    # Bytes the kernel actually moves (incl. the ragged last batch block).
    rows_read = grid_b * TB
    cost = pl.CostEstimate(
        flops=2 * B * K * N,
        transcendentals=0,
        bytes_accessed=(
            rows_read * K * in_itemsize       # x
            + N * K * in_itemsize             # weight
            + N * 4                           # bias
            + rows_read * N * out_itemsize    # y
        ),
    )

    out = pl.pallas_call(
        _linear_kernel,
        out_shape=jax.ShapeDtypeStruct((B, N), out_dtype),
        grid=(grid_b,),
        in_specs=[
            pl.BlockSpec((TB, K), lambda i: (i, 0)),   # x: batch-tiled, full K
            pl.BlockSpec((N, K), lambda i: (0, 0)),    # weight: resident
            pl.BlockSpec((1, N), lambda i: (0, 0)),    # bias (f32): resident
        ],
        out_specs=pl.BlockSpec((TB, N), lambda i: (i, 0)),  # full-N, unpadded
        compiler_params=pltpu.CompilerParams(
            dimension_semantics=("parallel",),  # dual-TC sharding on v7x
            vmem_limit_bytes=vmem_limit,
        ),
        cost_estimate=cost,
    )(x, weight, bias2d)

    return out


if __name__ == "__main__":
    # Small shapes consistent with the module: N=32 -> in_features = 2*32+1 = 65
    # NOTE: at these toy shapes the call is pure fixed overhead; the tiling
    # choices only matter once B (envs * timesteps) is large.
    N = 32
    in_features = 2 * N + 1
    B = 8

    key = jax.random.PRNGKey(0)
    kx, kw, kb = jax.random.split(key, 3)

    # Deterministic init mimicking PyTorch Linear default: U(-1/sqrt(in), 1/sqrt(in))
    bound = 1.0 / jnp.sqrt(jnp.float32(in_features))
    x = jax.random.normal(kx, (B, in_features), dtype=jnp.float32)
    weight = jax.random.uniform(kw, (N, in_features), jnp.float32, -bound, bound)
    bias = jax.random.uniform(kb, (N,), jnp.float32, -bound, bound)

    y = actor_forward(x, weight, bias)
    jax.block_until_ready(y)

    # Sanity check against plain JAX reference (f32 path: tight tolerance)
    y_ref = x @ weight.T + bias
    assert y.shape == (B, N)
    assert jnp.allclose(y, y_ref, atol=1e-5, rtol=1e-5)

    # Optional bf16 streaming path (halves x/weight HBM bytes, f32 accumulate)
    y_bf16 = actor_forward(x, weight, bias, compute_dtype=jnp.bfloat16)
    jax.block_until_ready(y_bf16)
    assert jnp.allclose(y_bf16, y_ref, atol=5e-2, rtol=5e-2)

    print("KERNEL_OK")
</pallas_src>

<mosaic_0001>
module attributes {stable_mosaic.version = 11 : i64} {
  func.func @_linear_kernel(%arg0: i32, %arg1: memref<8x65xf32, #tpu.memory_space<vmem>>, %arg2: memref<32x65xf32, #tpu.memory_space<vmem>>, %arg3: memref<1x32xf32, #tpu.memory_space<vmem>>, %arg4: memref<8x32xf32, #tpu.memory_space<vmem>>) attributes {dimension_semantics = [#tpu.dimension_semantics<parallel>], iteration_bounds = array<i64: 1>, scalar_prefetch = 0 : i64, scratch_operands = 0 : i64, tpu.core_type = #tpu.core_type<tc>, window_params = [{transform_indices = @transform_0, window_bounds = array<i64: 8, 65>}, {pipeline_mode = #tpu.pipeline_mode<synchronous>, transform_indices = @transform_1, window_bounds = array<i64: 32, 65>}, {pipeline_mode = #tpu.pipeline_mode<synchronous>, transform_indices = @transform_2, window_bounds = array<i64: 1, 32>}, {transform_indices = @transform_3, window_bounds = array<i64: 8, 32>}]} {
    %c0 = arith.constant 0 : index
    %c0_0 = arith.constant 0 : index
    %0 = vector.load %arg1[%c0, %c0_0] : memref<8x65xf32, #tpu.memory_space<vmem>>, vector<8x65xf32>
    %c0_1 = arith.constant 0 : index
    %c0_2 = arith.constant 0 : index
    %1 = vector.load %arg2[%c0_1, %c0_2] : memref<32x65xf32, #tpu.memory_space<vmem>>, vector<32x65xf32>
    %cst = arith.constant dense<0.000000e+00> : vector<8x32xf32>
    %2 = tpu.matmul %0, %1, %cst {dimension_numbers = #tpu.dot_dimension_numbers<[1], [1], [0], [0], [0, 0, 1, 0], [], []>} : vector<8x65xf32>, vector<32x65xf32>, vector<8x32xf32> -> vector<8x32xf32>
    %c0_3 = arith.constant 0 : index
    %c0_4 = arith.constant 0 : index
    %3 = vector.load %arg3[%c0_3, %c0_4] : memref<1x32xf32, #tpu.memory_space<vmem>>, vector<1x32xf32>
    %4 = vector.broadcast %3 : vector<1x32xf32> to vector<8x32xf32>
    %5 = arith.addf %2, %4 : vector<8x32xf32>
    %c0_5 = arith.constant 0 : index
    %c0_6 = arith.constant 0 : index
    %6 = vector.load %arg4[%c0_5, %c0_6] : memref<8x32xf32, #tpu.memory_space<vmem>>, vector<8x32xf32>
    tpu.vector_store %arg4[%c0_5, %c0_6], %5 {strides = array<i32>} : memref<8x32xf32, #tpu.memory_space<vmem>>, vector<8x32xf32>,
    return
  }
  func.func @transform_0(%arg0: i32) -> (i32, i32) {
    %c0_i32 = arith.constant 0 : i32
    %c0_i32_0 = arith.constant 0 : i32
    return %arg0, %c0_i32 : i32, i32
  }
  func.func @transform_1(%arg0: i32) -> (i32, i32) {
    %c0_i32 = arith.constant 0 : i32
    %c0_i32_0 = arith.constant 0 : i32
    %c0_i32_1 = arith.constant 0 : i32
    return %c0_i32, %c0_i32_0 : i32, i32
  }
  func.func @transform_2(%arg0: i32) -> (i32, i32) {
    %c0_i32 = arith.constant 0 : i32
    %c0_i32_0 = arith.constant 0 : i32
    %c0_i32_1 = arith.constant 0 : i32
    return %c0_i32, %c0_i32_0 : i32, i32
  }
  func.func @transform_3(%arg0: i32) -> (i32, i32) {
    %c0_i32 = arith.constant 0 : i32
    %c0_i32_0 = arith.constant 0 : i32
    return %arg0, %c0_i32 : i32, i32
  }
}

</mosaic_0001>

<llo_original>
// kernel: actor_forward.1
$region0: #{actor_forward.1}
  #allocation0 [shape = 'u32[]', space=smem, size = 0x4, offset = 0x4, fixed_abs, tag = 'smem constant byte address 0x4 - core index']
  #allocation1 [shape = 'u32[144,128]{1,0:T(1,128)}', space=vmem, size = 0x12000, scoped, tag = 'internal scratch']
  %s0 = inlined_call_operand.hbm [shape: f32[8,65], index: 0, kind: input, shape index: {}]
  %s1 = inlined_call_operand.hbm [shape: f32[32,65], index: 1, kind: input, shape index: {}]
  %s2 = inlined_call_operand.vmem [shape: f32[1,32], index: 2, kind: input, shape index: {}]
  %s3 = inlined_call_operand.hbm [shape: f32[8,32], index: 3, kind: output, shape index: {}]
  %s4 = sld [smem:[#allocation0]]
  $region30: #{actor_forward.1} parent=0
    _
  %s6 = ssub.s32 1, %s4
  %s7 = scalar_select 0, %s6, %s4
  $region1: #{actor_forward.1} parent=0
    #allocation2 [shape = 'u8[4096]{0}', space=vmem, size = 0x1000, scoped, tag = 'input window, operand 0, single buffered']
    #allocation3 [shape = 's32[1]{0}', space=sflag, size = 0x4, scoped, tag = 'scoped memory for actor_forward.1']
    #allocation4 [shape = 's32[1]{0}', space=sflag, size = 0x4, scoped, tag = 'scoped memory for actor_forward.1']
    #allocation5 [shape = 'u8[16384]{0}', space=vmem, size = 0x4000, scoped, tag = 'input window, operand 1, single buffered']
    #allocation6 [shape = 's32[1]{0}', space=sflag, size = 0x4, scoped, tag = 'scoped memory for actor_forward.1']
    #allocation7 [shape = 'u8[4096]{0}', space=vmem, size = 0x1000, scoped, tag = 'output window, operand 0, single buffered']
    %8 = vsyncpa [#allocation3], 0
    %9 = vsyncpa [#allocation6], 0
    %10 = vsyncpa [#allocation4], 0
    // Predicated region
    $region2: #{actor_forward.1} parent=1 // pred_check
      _
    $region3: #{actor_forward.1} parent=1 // pred_check_branch
      %12 = sbr.rel (0) target = $region5
    $region4: #{actor_forward.1} parent=1 // pred_region
      %s14 = ssub.s32 128, 128
      %15 = vsyncadd [#allocation3], %s14
      %s17 = sshll.u32 [#allocation2], 4
      %s18 = int_to_ptr.vmem [resolvable:$true] %s17
      %20 = dma.hbm_to_vmem [thread:$0]  %s0, 128, %s18, [#allocation3]
    $region5: #{actor_forward.1} parent=1 // pred_fallthru
      _
    // Predicated region
    $region6: #{actor_forward.1} parent=1 // pred_check
      _
    $region7: #{actor_forward.1} parent=1 // pred_check_branch
      %22 = sbr.rel (0) target = $region9
    $region8: #{actor_forward.1} parent=1 // pred_region
      %s24 = ssub.s32 512, 512
      %25 = vsyncadd [#allocation6], %s24
      %s26 = sshll.u32 [#allocation5], 4
      %s27 = int_to_ptr.vmem [resolvable:$true] %s26
      %32 = dma.hbm_to_vmem [thread:$0]  %s1, 512, %s27, [#allocation6], 128, 128, 8
    $region9: #{actor_forward.1} parent=1 // pred_fallthru
      _
    // Predicated region
    $region10: #{actor_forward.1} parent=1 // pred_check
      _
    $region11: #{actor_forward.1} parent=1 // pred_check_branch
      %34 = sbr.rel (0) target = $region13
    $region12: #{actor_forward.1} parent=1 // pred_region
      _
    $region13: #{actor_forward.1} parent=1 // pred_fallthru
      _
    // Predicated region
    $region14: #{actor_forward.1} parent=1 // pred_check
      _
    $region15: #{actor_forward.1} parent=1 // pred_check_branch
      %36 = sbr.rel (0) target = $region17
    $region16: #{actor_forward.1} parent=1 // pred_region
      %37 = dma.done [#allocation3], 128
    $region17: #{actor_forward.1} parent=1 // pred_fallthru
      _
    // Predicated region
    $region18: #{actor_forward.1} parent=1 // pred_check
      _
    $region19: #{actor_forward.1} parent=1 // pred_check_branch
      %39 = sbr.rel (0) target = $region21
    $region20: #{actor_forward.1} parent=1 // pred_region
      %40 = dma.done [#allocation6], 512
    $region21: #{actor_forward.1} parent=1 // pred_fallthru
      _
    %v41 = vld [vmem:[#allocation2] sm:$0xff]
    %v42 = vld [vmem:[#allocation5] sm:$0xff]
    %v43 = vld [vmem:[#allocation5 + $0x8] sm:$0xff]
    %v44 = vld [vmem:[#allocation5 + $0x10] sm:$0xff]
    %v45 = vld [vmem:[#allocation5 + $0x18] sm:$0xff]
    %v46 = vld [vmem:[%s2] sm:$0x1]
    %v48 = vlaneseq
    %v49 = vshrl.u32 %v48, 7
    %v50 = vsub.s32 0, %v49
    %v51 = vrot.slane %v46, %v50
    %vm53 = vcmask 531456
    %v55 = vsel %vm53, %v41, 0
    %v58 = vsel %vm53, %v42, 0
    %v61 = vsel %vm53, %v43, 0
    %v64 = vsel %vm53, %v44, 0
    %v67 = vsel %vm53, %v45, 0
    %69 = vmatprep.subr.mxu0 0.0
    %70 = vmatpush1.xpose.msra.mxu0 %v58
    %71 = vmatprep.subr.mxu0 0.0
    %72 = vmatpush1.xpose.msra.mxu0 %v61
    %73 = vmatprep.subr.mxu0 0.0
    %74 = vmatpush1.xpose.msra.mxu0 %v64
    %75 = vmatprep.subr.mxu0 0.0
    %76 = vmatpush1.xpose.msra.mxu0 %v67
    %77 = vmatprep.subr.mxu0 0.0
    %78 = vmatpush1.xpose.msra.mxu0 0.0
    %79 = vmatprep.subr.mxu0 0.0
    %80 = vmatpush1.xpose.msra.mxu0 0.0
    %81 = vmatprep.subr.mxu0 0.0
    %82 = vmatpush1.xpose.msra.mxu0 0.0
    %83 = vmatprep.subr.mxu0 0.0
    %84 = vmatpush1.xpose.msra.mxu0 0.0
    %85 = vmatprep.subr.mxu0 0.0
    %86 = vmatpush1.xpose.msra.mxu0 0.0
    %87 = vmatprep.subr.mxu0 0.0
    %88 = vmatpush1.xpose.msra.mxu0 0.0
    %89 = vmatprep.subr.mxu0 0.0
    %90 = vmatpush1.xpose.msra.mxu0 0.0
    %91 = vmatprep.subr.mxu0 0.0
    %92 = vmatpush1.xpose.msra.mxu0 0.0
    %93 = vmatprep.subr.mxu0 0.0
    %94 = vmatpush1.xpose.msra.mxu0 0.0
    %95 = vmatprep.subr.mxu0 0.0
    %96 = vmatpush1.xpose.msra.mxu0 0.0
    %97 = vmatprep.subr.mxu0 0.0
    %98 = vmatpush1.xpose.msra.mxu0 0.0
    %99 = vmatprep.subr.mxu0 0.0
    %100 = vmatpush1.xpose.msra.mxu0 0.0
    %101 = vmatprep.subr.mxu0 0.0
    %102 = vmatpush1.xpose.msra.mxu0 0.0
    %103 = vmatprep.subr.mxu0 0.0
    %104 = vmatpush1.xpose.msra.mxu0 0.0
    %105 = vmatprep.subr.mxu0 0.0
    %106 = vmatpush1.xpose.msra.mxu0 0.0
    %107 = vmatprep.subr.mxu0 0.0
    %108 = vmatpush1.xpose.msra.mxu0 0.0
    %109 = vmatprep.subr.mxu0 0.0
    %110 = vmatpush1.xpose.msra.mxu0 0.0
    %111 = vmatprep.subr.mxu0 0.0
    %112 = vmatpush1.xpose.msra.mxu0 0.0
    %113 = vmatprep.subr.mxu0 0.0
    %114 = vmatpush1.xpose.msra.mxu0 0.0
    %115 = vmatprep.subr.mxu0 0.0
    %116 = vmatpush1.xpose.msra.mxu0 0.0
    %117 = vmatprep.subr.mxu0 0.0
    %118 = vmatpush1.xpose.msra.mxu0 0.0
    %119 = vmatprep.subr.mxu0 0.0
    %120 = vmatpush1.xpose.msra.mxu0 0.0
    %121 = vmatprep.subr.mxu0 0.0
    %122 = vmatpush1.xpose.msra.mxu0 0.0
    %123 = vmatprep.subr.mxu0 0.0
    %124 = vmatpush1.xpose.msra.mxu0 0.0
    %125 = vmatprep.subr.mxu0 0.0
    %126 = vmatpush1.xpose.msra.mxu0 0.0
    %127 = vmatprep.subr.mxu0 0.0
    %128 = vmatpush1.xpose.msra.mxu0 0.0
    %129 = vmatprep.subr.mxu0 0.0
    %130 = vmatpush1.xpose.msra.mxu0 0.0
    %131 = vmatprep.subr.mxu0 0.0
    %132 = vmatpush1.xpose.msra.mxu0 0.0
    %133 = vmatprep.mubr.f32.mxu0 0.0
    %134 = vmatmul.mubr.f32.gmra.mrb[0].mxu0 %v55
    %v135 = vpop.f32.mrb[0].mxu0
    %v136 = vadd.f32 %v51, %v135
    %v137 = vpop.f32.mrb[0].mxu0
    %138 = vdwg.mxu0
    %vm139 = vcmask 261120
    %140 = vst.msk [vmem:[#allocation7] sm:$0xff] %vm139, %v136
    // Predicated region
    $region22: #{actor_forward.1} parent=1 // pred_check
      _
    $region23: #{actor_forward.1} parent=1 // pred_check_branch
      %142 = sbr.rel (0) target = $region25
    $region24: #{actor_forward.1} parent=1 // pred_region
      %s144 = ssub.s32 128, 128
      %145 = vsyncadd [#allocation4], %s144
      %s147 = sshll.u32 [#allocation7], 4
      %s148 = int_to_ptr.vmem [resolvable:$true] %s147
      %150 = dma.vmem_to_hbm [thread:$0]  %s148, 128, %s3, [#allocation4]
    $region25: #{actor_forward.1} parent=1 // pred_fallthru
      _
    // Predicated region
    $region26: #{actor_forward.1} parent=1 // pred_check
      _
    $region27: #{actor_forward.1} parent=1 // pred_check_branch
      %152 = sbr.rel (0) target = $region29
    $region28: #{actor_forward.1} parent=1 // pred_region
      %153 = dma.done [#allocation4], 128
    $region29: #{actor_forward.1} parent=1 // pred_fallthru
      _
    %154 = vsyncpa [#allocation3], 1
    %155 = vsyncpa [#allocation6], 1
    %156 = vsyncpa [#allocation4], 1

</llo_original>
